<compile_context>
chip_gen: v5e
topology: v5e:2x2
jax: 0.10.0
libtpu: 0.0.40
codegen_flags: <defaults>
</compile_context>

<pallas_src>
import functools
import math

import jax
import jax.numpy as jnp
from jax import lax
from jax.experimental import pallas as pl
from jax.experimental.pallas import tpu as pltpu


# ---------------------------------------------------------------------------
# Kernel 1: transform (Linear -> ReLU -> Linear) fused with row-wise L2
# normalization and the 1/sqrt(tau) temperature scaling.
# ---------------------------------------------------------------------------
def _transform_kernel(x_ref, w1_ref, b1_ref, w2_ref, b2_ref, z_ref, *,
                      inv_sqrt_tau):
    x = x_ref[...].astype(jnp.float32)                      # (TB, H)
    w1 = w1_ref[...].astype(jnp.float32)                    # (H, H)
    w2 = w2_ref[...].astype(jnp.float32)                    # (H, H)
    b1 = b1_ref[...].astype(jnp.float32)                    # (1, H)
    b2 = b2_ref[...].astype(jnp.float32)                    # (1, H)

    h = jnp.dot(x, w1, preferred_element_type=jnp.float32) + b1
    h = jnp.maximum(h, 0.0)                                 # ReLU
    z = jnp.dot(h, w2, preferred_element_type=jnp.float32) + b2

    # F.normalize(p=2, dim=1) semantics (eps = 1e-12), then 1/sqrt(tau).
    norm = jnp.maximum(jnp.sqrt(jnp.sum(z * z, axis=1, keepdims=True)), 1e-12)
    z_ref[...] = (z / norm * inv_sqrt_tau).astype(z_ref.dtype)


# ---------------------------------------------------------------------------
# Kernel 2: NTXent loss from the normalized embeddings.
# Grid iterates over row tiles; the (1,1) output block is resident across the
# whole grid and used as the accumulator (init at step 0, finalize at last).
# ---------------------------------------------------------------------------
def _ntxent_loss_kernel(zr_ref, zall_ref, o_ref, *, n, pos_offset, inv_n,
                        tile_rows):
    step = pl.program_id(0)

    @pl.when(step == 0)
    def _():
        o_ref[...] = jnp.zeros_like(o_ref)

    zr = zr_ref[...].astype(jnp.float32)     # (TR, H) rows handled this step
    za = zall_ref[...].astype(jnp.float32)   # (n,  H) all rows (resident block)

    # sim[r, c] = <z_r, z_c>, contracting on the hidden axis (MXU).
    sim = lax.dot_general(zr, za, (((1,), (1,)), ((), ())),
                          preferred_element_type=jnp.float32)      # (TR, n)

    row = lax.broadcasted_iota(jnp.int32, sim.shape, 0) + step * tile_rows
    col = lax.broadcasted_iota(jnp.int32, sim.shape, 1)

    # Mask self-similarity: sim[i, i] = -1e9 (matches the reference).
    sim = jnp.where(col == row, jnp.float32(-1e9), sim)

    # Stable row-wise logsumexp.
    m = jnp.max(sim, axis=1, keepdims=True)
    lse = m + jnp.log(jnp.sum(jnp.exp(sim - m), axis=1, keepdims=True))  # (TR,1)

    # Positive column for global row i is (i + n//2) % n  (no % needed:
    # 0 <= row < n and 0 <= pos_offset < n  =>  a single conditional subtract).
    pos = row + pos_offset
    pos = jnp.where(pos >= n, pos - n, pos)
    pos_sim = jnp.sum(jnp.where(col == pos, sim, 0.0), axis=1, keepdims=True)

    # Rows past the true batch size (ragged last tile) contribute nothing.
    valid = row[:, :1] < n
    contrib = jnp.where(valid, pos_sim - lse, 0.0)                   # (TR, 1)
    o_ref[...] += jnp.sum(contrib, axis=0, keepdims=True)            # (1, 1)

    @pl.when(step == pl.num_programs(0) - 1)
    def _():
        o_ref[...] = o_ref[...] * (-inv_n)


# ---------------------------------------------------------------------------
# Wrapper
# ---------------------------------------------------------------------------
def ntxent_forward(x, w1, b1, w2, b2, *, tau=1.0, block_rows=128):
    """NTXent forward loss (eval-mode dropout).

    x       : (n, H) input features (pairs are (i, i + n//2) as in the reference).
    w1, w2  : (H, H) linear weights in (in, out) layout (= torch weight.T).
    b1, b2  : (H,)   biases.
    Returns a scalar float32 loss.
    """
    n, H = x.shape
    assert w1.shape == (H, H) and w2.shape == (H, H)
    assert b1.shape == (H,) and b2.shape == (H,)
    assert block_rows % 8 == 0

    inv_sqrt_tau = float(1.0 / math.sqrt(tau))
    b1 = b1.reshape(1, H)
    b2 = b2.reshape(1, H)

    # ---- phase 1: projection head + normalize, tiled over the batch --------
    tb = n if n <= block_rows else block_rows     # full dim or a multiple of 8
    z = pl.pallas_call(
        functools.partial(_transform_kernel, inv_sqrt_tau=inv_sqrt_tau),
        out_shape=jax.ShapeDtypeStruct((n, H), jnp.float32),
        grid=(pl.cdiv(n, tb),),
        in_specs=[
            pl.BlockSpec((tb, H), lambda i: (i, 0)),   # x row tile
            pl.BlockSpec((H, H), lambda i: (0, 0)),    # W1 (resident)
            pl.BlockSpec((1, H), lambda i: (0, 0)),    # b1
            pl.BlockSpec((H, H), lambda i: (0, 0)),    # W2 (resident)
            pl.BlockSpec((1, H), lambda i: (0, 0)),    # b2
        ],
        out_specs=pl.BlockSpec((tb, H), lambda i: (i, 0)),
        compiler_params=pltpu.CompilerParams(
            dimension_semantics=("parallel",)),
    )(x, w1, b1, w2, b2)

    # ---- phase 2: all-pairs sim + log-softmax + positive gather -> scalar --
    tr = n if n <= block_rows else block_rows
    loss = pl.pallas_call(
        functools.partial(_ntxent_loss_kernel, n=n, pos_offset=n // 2,
                          inv_n=float(1.0 / n), tile_rows=tr),
        out_shape=jax.ShapeDtypeStruct((1, 1), jnp.float32),
        grid=(pl.cdiv(n, tr),),
        in_specs=[
            pl.BlockSpec((tr, H), lambda i: (i, 0)),   # query row tile of z
            pl.BlockSpec((n, H), lambda i: (0, 0)),    # all of z (resident)
        ],
        out_specs=pl.BlockSpec((1, 1), lambda i: (0, 0)),
        compiler_params=pltpu.CompilerParams(
            dimension_semantics=("arbitrary",)),       # grid axis is a reduction
    )(z, z)

    return loss[0, 0]


if __name__ == "__main__":
    key = jax.random.PRNGKey(0)
    n, H = 8, 32          # small test shapes: batch=8, hidden=32
    tau = 0.5
    kx, k1, kb1, k2, kb2 = jax.random.split(key, 5)
    x = jax.random.normal(kx, (n, H), dtype=jnp.float32)
    w1 = jax.random.normal(k1, (H, H), dtype=jnp.float32) * 0.1
    b1 = jax.random.normal(kb1, (H,), dtype=jnp.float32) * 0.1
    w2 = jax.random.normal(k2, (H, H), dtype=jnp.float32) * 0.1
    b2 = jax.random.normal(kb2, (H,), dtype=jnp.float32) * 0.1

    loss = jax.block_until_ready(ntxent_forward(x, w1, b1, w2, b2, tau=tau))

    # Pure-JAX reference (eval-mode dropout == identity).
    def ref_loss(x, w1, b1, w2, b2, tau):
        hp = jax.lax.Precision.HIGHEST
        h = jnp.maximum(jnp.dot(x, w1, precision=hp) + b1, 0.0)
        z = jnp.dot(h, w2, precision=hp) + b2
        z = z / jnp.maximum(jnp.linalg.norm(z, axis=1, keepdims=True), 1e-12)
        z = z / jnp.sqrt(tau)
        nn_ = x.shape[0]
        sim = jnp.dot(z, z.T, precision=hp)
        sim = sim.at[jnp.arange(nn_), jnp.arange(nn_)].set(-1e9)
        logprob = jax.nn.log_softmax(sim, axis=1)
        labels = (jnp.arange(nn_) + nn_ // 2) % nn_
        return -logprob[jnp.arange(nn_), labels].sum() / nn_

    ref = ref_loss(x, w1, b1, w2, b2, tau)
    assert loss.shape == ()
    assert jnp.allclose(loss, ref, atol=1e-4, rtol=1e-4), (loss, ref)
    print("KERNEL_OK")
</pallas_src>

<mosaic_0001>
module attributes {stable_mosaic.version = 11 : i64} {
  func.func @_transform_kernel(%arg0: i32, %arg1: memref<8x32xf32, #tpu.memory_space<vmem>>, %arg2: memref<32x32xf32, #tpu.memory_space<vmem>>, %arg3: memref<1x32xf32, #tpu.memory_space<vmem>>, %arg4: memref<32x32xf32, #tpu.memory_space<vmem>>, %arg5: memref<1x32xf32, #tpu.memory_space<vmem>>, %arg6: memref<8x32xf32, #tpu.memory_space<vmem>>) attributes {dimension_semantics = [#tpu.dimension_semantics<parallel>], iteration_bounds = array<i64: 1>, scalar_prefetch = 0 : i64, scratch_operands = 0 : i64, tpu.core_type = #tpu.core_type<tc>, window_params = [{transform_indices = @transform_0, window_bounds = array<i64: 8, 32>}, {pipeline_mode = #tpu.pipeline_mode<synchronous>, transform_indices = @transform_1, window_bounds = array<i64: 32, 32>}, {pipeline_mode = #tpu.pipeline_mode<synchronous>, transform_indices = @transform_2, window_bounds = array<i64: 1, 32>}, {pipeline_mode = #tpu.pipeline_mode<synchronous>, transform_indices = @transform_3, window_bounds = array<i64: 32, 32>}, {pipeline_mode = #tpu.pipeline_mode<synchronous>, transform_indices = @transform_4, window_bounds = array<i64: 1, 32>}, {transform_indices = @transform_5, window_bounds = array<i64: 8, 32>}]} {
    %c0 = arith.constant 0 : index
    %c0_0 = arith.constant 0 : index
    %0 = vector.load %arg1[%c0, %c0_0] : memref<8x32xf32, #tpu.memory_space<vmem>>, vector<8x32xf32>
    %c0_1 = arith.constant 0 : index
    %c0_2 = arith.constant 0 : index
    %1 = vector.load %arg2[%c0_1, %c0_2] : memref<32x32xf32, #tpu.memory_space<vmem>>, vector<32x32xf32>
    %c0_3 = arith.constant 0 : index
    %c0_4 = arith.constant 0 : index
    %2 = vector.load %arg4[%c0_3, %c0_4] : memref<32x32xf32, #tpu.memory_space<vmem>>, vector<32x32xf32>
    %c0_5 = arith.constant 0 : index
    %c0_6 = arith.constant 0 : index
    %3 = vector.load %arg3[%c0_5, %c0_6] : memref<1x32xf32, #tpu.memory_space<vmem>>, vector<1x32xf32>
    %c0_7 = arith.constant 0 : index
    %c0_8 = arith.constant 0 : index
    %4 = vector.load %arg5[%c0_7, %c0_8] : memref<1x32xf32, #tpu.memory_space<vmem>>, vector<1x32xf32>
    %cst = arith.constant dense<0.000000e+00> : vector<8x32xf32>
    %5 = tpu.matmul %0, %1, %cst {dimension_numbers = #tpu.dot_dimension_numbers<[1], [0], [0], [1], [0, 0, 1, 1], [], []>} : vector<8x32xf32>, vector<32x32xf32>, vector<8x32xf32> -> vector<8x32xf32>
    %6 = vector.broadcast %3 : vector<1x32xf32> to vector<8x32xf32>
    %7 = arith.addf %5, %6 : vector<8x32xf32>
    %cst_9 = arith.constant 0.000000e+00 : f32
    %8 = vector.broadcast %cst_9 : f32 to vector<8x32xf32>
    %9 = arith.maximumf %7, %8 : vector<8x32xf32>
    %cst_10 = arith.constant dense<0.000000e+00> : vector<8x32xf32>
    %10 = tpu.matmul %9, %2, %cst_10 {dimension_numbers = #tpu.dot_dimension_numbers<[1], [0], [0], [1], [0, 0, 1, 1], [], []>} : vector<8x32xf32>, vector<32x32xf32>, vector<8x32xf32> -> vector<8x32xf32>
    %11 = vector.broadcast %4 : vector<1x32xf32> to vector<8x32xf32>
    %12 = arith.addf %10, %11 : vector<8x32xf32>
    %13 = arith.mulf %12, %12 : vector<8x32xf32>
    %cst_11 = arith.constant dense<0.000000e+00> : vector<8xf32>
    %14 = vector.multi_reduction <add>, %13, %cst_11 [1] : vector<8x32xf32> to vector<8xf32>
    %15 = vector.shape_cast %14 : vector<8xf32> to vector<8x1xf32>
    %16 = math.sqrt %15 : vector<8x1xf32>
    %cst_12 = arith.constant 9.99999996E-13 : f32
    %17 = vector.broadcast %cst_12 : f32 to vector<8x1xf32>
    %18 = arith.maximumf %16, %17 : vector<8x1xf32>
    %19 = vector.broadcast %18 : vector<8x1xf32> to vector<8x32xf32>
    %20 = arith.divf %12, %19 : vector<8x32xf32>
    %cst_13 = arith.constant 1.41421354 : f32
    %21 = vector.broadcast %cst_13 : f32 to vector<8x32xf32>
    %22 = arith.mulf %20, %21 : vector<8x32xf32>
    %c0_14 = arith.constant 0 : index
    %c0_15 = arith.constant 0 : index
    %23 = vector.load %arg6[%c0_14, %c0_15] : memref<8x32xf32, #tpu.memory_space<vmem>>, vector<8x32xf32>
    tpu.vector_store %arg6[%c0_14, %c0_15], %22 {strides = array<i32>} : memref<8x32xf32, #tpu.memory_space<vmem>>, vector<8x32xf32>,
    return
  }
  func.func @transform_0(%arg0: i32) -> (i32, i32) {
    %c0_i32 = arith.constant 0 : i32
    %c0_i32_0 = arith.constant 0 : i32
    return %arg0, %c0_i32 : i32, i32
  }
  func.func @transform_1(%arg0: i32) -> (i32, i32) {
    %c0_i32 = arith.constant 0 : i32
    %c0_i32_0 = arith.constant 0 : i32
    %c0_i32_1 = arith.constant 0 : i32
    return %c0_i32, %c0_i32_0 : i32, i32
  }
  func.func @transform_2(%arg0: i32) -> (i32, i32) {
    %c0_i32 = arith.constant 0 : i32
    %c0_i32_0 = arith.constant 0 : i32
    %c0_i32_1 = arith.constant 0 : i32
    return %c0_i32, %c0_i32_0 : i32, i32
  }
  func.func @transform_3(%arg0: i32) -> (i32, i32) {
    %c0_i32 = arith.constant 0 : i32
    %c0_i32_0 = arith.constant 0 : i32
    %c0_i32_1 = arith.constant 0 : i32
    return %c0_i32, %c0_i32_0 : i32, i32
  }
  func.func @transform_4(%arg0: i32) -> (i32, i32) {
    %c0_i32 = arith.constant 0 : i32
    %c0_i32_0 = arith.constant 0 : i32
    %c0_i32_1 = arith.constant 0 : i32
    return %c0_i32, %c0_i32_0 : i32, i32
  }
  func.func @transform_5(%arg0: i32) -> (i32, i32) {
    %c0_i32 = arith.constant 0 : i32
    %c0_i32_0 = arith.constant 0 : i32
    return %arg0, %c0_i32 : i32, i32
  }
}

</mosaic_0001>

<llo_original>
// kernel: tpu_custom_call.1
$region0: #{tpu_custom_call.1}
  #allocation0 [shape = 'u32[]', space=smem, size = 0x4, offset = 0x4, fixed_abs, tag = 'smem constant byte address 0x4 - core index']
  #allocation1 [shape = 'u32[72,128]{1,0:T(1,128)}', space=vmem, size = 0x9000, scoped, tag = 'internal scratch']
  %s0 = inlined_call_operand.hbm [shape: f32[8,32], index: 0, kind: input, shape index: {}]
  %s1 = inlined_call_operand.hbm [shape: f32[32,32], index: 1, kind: input, shape index: {}]
  %s2 = inlined_call_operand.vmem [shape: f32[1,32], index: 2, kind: input, shape index: {}]
  %s3 = inlined_call_operand.hbm [shape: f32[32,32], index: 3, kind: input, shape index: {}]
  %s4 = inlined_call_operand.vmem [shape: f32[1,32], index: 4, kind: input, shape index: {}]
  %s5 = inlined_call_operand.hbm [shape: f32[8,32], index: 5, kind: output, shape index: {}]
  %s6 = sld [smem:[#allocation0]]
  $region42: #{tpu_custom_call.1} parent=0
    _
  %s8 = ssub.s32 1, %s6
  %s9 = scalar_select 0, %s8, %s6
  $region1: #{tpu_custom_call.1} parent=0
    #allocation2 [shape = 'u8[4096]{0}', space=vmem, size = 0x1000, scoped, tag = 'input window, operand 0, single buffered']
    #allocation3 [shape = 's32[1]{0}', space=sflag, size = 0x4, scoped, tag = 'scoped memory for tpu_custom_call.1']
    #allocation4 [shape = 's32[1]{0}', space=sflag, size = 0x4, scoped, tag = 'scoped memory for tpu_custom_call.1']
    #allocation5 [shape = 'u8[16384]{0}', space=vmem, size = 0x4000, scoped, tag = 'input window, operand 1, single buffered']
    #allocation6 [shape = 's32[1]{0}', space=sflag, size = 0x4, scoped, tag = 'scoped memory for tpu_custom_call.1']
    #allocation7 [shape = 'u8[16384]{0}', space=vmem, size = 0x4000, scoped, tag = 'input window, operand 3, single buffered']
    #allocation8 [shape = 'u8[4096]{0}', space=vmem, size = 0x1000, scoped, tag = 'output window, operand 0, single buffered']
    %10 = vsyncpa [#allocation3], 0
    %11 = vsyncpa [#allocation6], 0
    %12 = vsyncpa [#allocation4], 0
    // Predicated region
    $region2: #{tpu_custom_call.1} parent=1 // pred_check
      _
    $region3: #{tpu_custom_call.1} parent=1 // pred_check_branch
      %14 = sbr.rel (0) target = $region5
    $region4: #{tpu_custom_call.1} parent=1 // pred_region
      %16 = vsyncadd [#allocation3], 0
      %s18 = sshll.u32 %s0, 4
      %s19 = int_to_ptr.hbm [resolvable:$true] %s18
      %s20 = sshll.u32 [#allocation2], 4
      %s21 = int_to_ptr.vmem [resolvable:$true] %s20
      %23 = dma.hbm_to_vmem [thread:$0]  %s19, 128, %s21, [#allocation3]
    $region5: #{tpu_custom_call.1} parent=1 // pred_fallthru
      _
    // Predicated region
    $region6: #{tpu_custom_call.1} parent=1 // pred_check
      _
    $region7: #{tpu_custom_call.1} parent=1 // pred_check_branch
      %25 = sbr.rel (0) target = $region9
    $region8: #{tpu_custom_call.1} parent=1 // pred_region
      %27 = vsyncadd [#allocation6], 0
      %s28 = sshll.u32 %s1, 4
      %s29 = int_to_ptr.hbm [resolvable:$true] %s28
      %s30 = sshll.u32 [#allocation5], 4
      %s31 = int_to_ptr.vmem [resolvable:$true] %s30
      %36 = dma.hbm_to_vmem [thread:$0]  %s29, 512, %s31, [#allocation6], 128, 128, 8
    $region9: #{tpu_custom_call.1} parent=1 // pred_fallthru
      _
    // Predicated region
    $region10: #{tpu_custom_call.1} parent=1 // pred_check
      _
    $region11: #{tpu_custom_call.1} parent=1 // pred_check_branch
      %38 = sbr.rel (0) target = $region13
    $region12: #{tpu_custom_call.1} parent=1 // pred_region
      _
    $region13: #{tpu_custom_call.1} parent=1 // pred_fallthru
      _
    // Predicated region
    $region14: #{tpu_custom_call.1} parent=1 // pred_check
      _
    $region15: #{tpu_custom_call.1} parent=1 // pred_check_branch
      %40 = sbr.rel (0) target = $region17
    $region16: #{tpu_custom_call.1} parent=1 // pred_region
      %42 = vsyncadd [#allocation6], 0
      %s43 = sshll.u32 %s3, 4
      %s44 = int_to_ptr.hbm [resolvable:$true] %s43
      %s45 = sshll.u32 [#allocation7], 4
      %s46 = int_to_ptr.vmem [resolvable:$true] %s45
      %51 = dma.hbm_to_vmem [thread:$0]  %s44, 512, %s46, [#allocation6], 128, 128, 8
    $region17: #{tpu_custom_call.1} parent=1 // pred_fallthru
      _
    // Predicated region
    $region18: #{tpu_custom_call.1} parent=1 // pred_check
      _
    $region19: #{tpu_custom_call.1} parent=1 // pred_check_branch
      %53 = sbr.rel (0) target = $region21
    $region20: #{tpu_custom_call.1} parent=1 // pred_region
      _
    $region21: #{tpu_custom_call.1} parent=1 // pred_fallthru
      _
    // Predicated region
    $region22: #{tpu_custom_call.1} parent=1 // pred_check
      _
    $region23: #{tpu_custom_call.1} parent=1 // pred_check_branch
      %55 = sbr.rel (0) target = $region25
    $region24: #{tpu_custom_call.1} parent=1 // pred_region
      %57 = dma.done [#allocation3], 128
    $region25: #{tpu_custom_call.1} parent=1 // pred_fallthru
      _
    // Predicated region
    $region26: #{tpu_custom_call.1} parent=1 // pred_check
      _
    $region27: #{tpu_custom_call.1} parent=1 // pred_check_branch
      %59 = sbr.rel (0) target = $region29
    $region28: #{tpu_custom_call.1} parent=1 // pred_region
      %61 = dma.done [#allocation6], 512
    $region29: #{tpu_custom_call.1} parent=1 // pred_fallthru
      _
    // Predicated region
    $region30: #{tpu_custom_call.1} parent=1 // pred_check
      _
    $region31: #{tpu_custom_call.1} parent=1 // pred_check_branch
      %63 = sbr.rel (0) target = $region33
    $region32: #{tpu_custom_call.1} parent=1 // pred_region
      %65 = dma.done [#allocation6], 512
    $region33: #{tpu_custom_call.1} parent=1 // pred_fallthru
      _
    %v66 = vld [vmem:[#allocation2] sm:$0xff]
    %v67 = vld [vmem:[#allocation5] sm:$0xff]
    %v68 = vld [vmem:[#allocation5 + $0x8] sm:$0xff]
    %v69 = vld [vmem:[#allocation5 + $0x10] sm:$0xff]
    %v70 = vld [vmem:[#allocation5 + $0x18] sm:$0xff]
    %v71 = vld [vmem:[#allocation7] sm:$0xff]
    %v72 = vld [vmem:[#allocation7 + $0x8] sm:$0xff]
    %v73 = vld [vmem:[#allocation7 + $0x10] sm:$0xff]
    %v74 = vld [vmem:[#allocation7 + $0x18] sm:$0xff]
    %v75 = vld [vmem:[%s2] sm:$0x1]
    %v76 = vld [vmem:[%s4] sm:$0x1]
    %v78 = vperm.slane %v75, 0
    %vm80 = vcmask 261120
    %v82 = vsel %vm80, %v66, 0
    %84 = vmatpush.msra.mxu0 0.0
    %85 = vmatpush.msra.mxu0 0.0
    %86 = vmatpush.msra.mxu0 0.0
    %87 = vmatpush.msra.mxu0 0.0
    %88 = vmatpush.msra.mxu0 0.0
    %89 = vmatpush.msra.mxu0 0.0
    %90 = vmatpush.msra.mxu0 0.0
    %91 = vmatpush.msra.mxu0 0.0
    %92 = vmatpush.msra.mxu0 0.0
    %93 = vmatpush.msra.mxu0 0.0
    %94 = vmatpush.msra.mxu0 0.0
    %95 = vmatpush.msra.mxu0 0.0
    %96 = vmatpush.msra.mxu0 %v70
    %97 = vmatpush.msra.mxu0 %v69
    %98 = vmatpush.msra.mxu0 %v68
    %99 = vmatpush.msra.mxu0 %v67
    %100 = vmatmul.f32.gmra.mxu0 %v82
    %v101 = vpop.f32.mrf.mxu0
    %v102 = vadd.f32 %v78, %v101
    %103 = vdwg.mxu0
    %v104 = vmax.f32 %v102, 0.0
    %v106 = vperm.slane %v76, 0
    %v109 = vsel %vm80, %v104, 0
    %111 = vmatpush.msra.mxu0 0.0
    %112 = vmatpush.msra.mxu0 0.0
    %113 = vmatpush.msra.mxu0 0.0
    %114 = vmatpush.msra.mxu0 0.0
    %115 = vmatpush.msra.mxu0 0.0
    %116 = vmatpush.msra.mxu0 0.0
    %117 = vmatpush.msra.mxu0 0.0
    %118 = vmatpush.msra.mxu0 0.0
    %119 = vmatpush.msra.mxu0 0.0
    %120 = vmatpush.msra.mxu0 0.0
    %121 = vmatpush.msra.mxu0 0.0
    %122 = vmatpush.msra.mxu0 0.0
    %123 = vmatpush.msra.mxu0 %v74
    %124 = vmatpush.msra.mxu0 %v73
    %125 = vmatpush.msra.mxu0 %v72
    %126 = vmatpush.msra.mxu0 %v71
    %127 = vmatmul.f32.gmra.mxu0 %v109
    %v128 = vpop.f32.mrf.mxu0
    %v129 = vadd.f32 %v106, %v128
    %130 = vdwg.mxu0
    %v131 = vmul.f32 %v129, %v129
    %v132 = vsel %vm80, %v131, 0.0
    %133 = vadd.xlane.f32.xlu0 %v132
    %v134 = vpop.xlane.xlu0 %133
    %v135 = vrsqrt.pop %v134
    %v136 = vmul.f32 %v135, %v134
    %v137 = vmul.f32 %v136, %v135
    %v138 = vmul.f32 0.5, %v137
    %v139 = vsub.f32 1.5, %v138
    %v140 = vmul.f32 %v135, %v139
    %v141 = vmul.f32 %v134, %v140
    %vm142 = vcmp.eq.f32.partialorder %v134, inf
    %v143 = vsel %vm142, %v134, %v141
    %vm144 = vcmp.eq.f32.partialorder %v134, 0.0
    %v145 = vand.u32 %v134, 2147483648
    %v146 = vsel %vm144, %v145, %v143
    %v147 = vmax.f32 %v146, 1e-12
    %v148 = vrcp.pop %v147
    %v149 = vmul.f32 %v147, %v148
    %v150 = vsub.f32 1.0, %v149
    %v151 = vmul.f32 %v148, %v150
    %v152 = vadd.f32 %v148, %v151
    %vm153 = vweird.f32 %v147
    %vm154 = vweird.f32 %v148
    %vm155 = vmor %vm153, %vm154
    %v156 = vsel %vm155, %v148, %v152
    %v157 = vand.u32 2147483647, %v147
    %vm158 = vcmp.eq.f32.partialorder %v157, 8.507059e+37
    %v159 = vand.u32 %v147, 2147483648
    %v160 = vor.u32 1.1754944e-38, %v159
    %v161 = vsel %vm158, %v160, %v156
    %v162 = vmul.f32 %v129, %v161
    %v163 = vmul.f32 %v162, 1.4142135
    %164 = vst.msk [vmem:[#allocation8] sm:$0xff] %vm80, %v163
    // Predicated region
    $region34: #{tpu_custom_call.1} parent=1 // pred_check
      _
    $region35: #{tpu_custom_call.1} parent=1 // pred_check_branch
      %166 = sbr.rel (0) target = $region37
    $region36: #{tpu_custom_call.1} parent=1 // pred_region
      %168 = vsyncadd [#allocation4], 0
      %s170 = sshll.u32 [#allocation8], 4
      %s171 = int_to_ptr.vmem [resolvable:$true] %s170
      %s172 = sshll.u32 %s5, 4
      %s173 = int_to_ptr.hbm [resolvable:$true] %s172
      %175 = dma.vmem_to_hbm [thread:$0]  %s171, 128, %s173, [#allocation4]
    $region37: #{tpu_custom_call.1} parent=1 // pred_fallthru
      _
    // Predicated region
    $region38: #{tpu_custom_call.1} parent=1 // pred_check
      _
    $region39: #{tpu_custom_call.1} parent=1 // pred_check_branch
      %177 = sbr.rel (0) target = $region41
    $region40: #{tpu_custom_call.1} parent=1 // pred_region
      %179 = dma.done [#allocation4], 128
    $region41: #{tpu_custom_call.1} parent=1 // pred_fallthru
      _
    %180 = vsyncpa [#allocation3], 1
    %181 = vsyncpa [#allocation6], 1
    %182 = vsyncpa [#allocation4], 1

</llo_original>
